<compile_context>
chip_gen: v5e
topology: v5e:2x2
jax: 0.10.0
libtpu: 0.0.40
codegen_flags: <defaults>
</compile_context>

<pallas_src>
import functools

import jax
import jax.numpy as jnp
from jax import lax
from jax.experimental import pallas as pl
from jax.experimental.pallas import tpu as pltpu

_EPS = 1e-12  # matches torch.nn.functional.normalize default eps


def _round_up(x, m):
    return (x + m - 1) // m * m


# ---------------------------------------------------------------------------
# Pallas kernel: fused normalize + cdist + top-k(smallest) + exp + L1-normalize
# ---------------------------------------------------------------------------
def _knn_kernel(x_ref, rt_ref, rsq_ref, o_ref, *, k, sigma, n_valid):
    tb = x_ref.shape[0]
    kp = o_ref.shape[1]

    x = x_ref[...].astype(jnp.float32)                        # (TB, Dp)

    # --- F.normalize(x, dim=1): x / max(||x||_2, eps) ---
    xsq = jnp.sum(x * x, axis=1, keepdims=True)               # (TB, 1)
    xn = x / jnp.maximum(jnp.sqrt(xsq), _EPS)
    xn_sq = jnp.sum(xn * xn, axis=1, keepdims=True)           # (TB, 1)

    # --- Euclidean distances via MXU: ||a-b||^2 = ||a||^2 + ||b||^2 - 2 a.b ---
    s = jnp.dot(xn, rt_ref[...], preferred_element_type=jnp.float32)  # (TB, Mp)
    d2 = jnp.maximum(xn_sq + rsq_ref[...] - 2.0 * s, 0.0)
    dist = jnp.sqrt(d2)                                        # (TB, Mp)

    # mask padded reference columns so they are never selected
    col = lax.broadcasted_iota(jnp.int32, dist.shape, 1)
    dist = jnp.where(col < n_valid, dist, jnp.inf)

    # --- iterative k-smallest selection (k is small & static) ---
    lane_k = lax.broadcasted_iota(jnp.int32, (tb, kp), 1)      # (TB, Kp)
    w = jnp.zeros((tb, kp), jnp.float32)
    for i in range(k):
        m = jnp.min(dist, axis=1, keepdims=True)               # (TB, 1) i-th smallest
        # first column achieving the min, then knock out exactly that column
        idx = jnp.min(jnp.where(dist == m, col, jnp.int32(dist.shape[1])),
                      axis=1, keepdims=True)
        dist = jnp.where(col == idx, jnp.inf, dist)
        # place exp(-d_i / sigma) into output lane i (ascending-distance order,
        # matching torch.topk(largest=False))
        w = jnp.where(lane_k == i, jnp.exp(-m / sigma), w)

    # --- F.normalize(w, p=1, dim=1) ---
    wsum = jnp.sum(w, axis=1, keepdims=True)
    w = w / jnp.maximum(wsum, _EPS)
    o_ref[...] = w.astype(o_ref.dtype)


# ---------------------------------------------------------------------------
# Wrapper
# ---------------------------------------------------------------------------
def knn_forward(params, x):
    """x: (B, feature_dim) -> (B, k) weights."""
    k = params["k"]
    sigma = float(params["sigma"])
    refs = params["reference_points"]
    B = x.shape[0]
    if refs is None:
        # matches: torch.zeros(x.size(0), self.k)
        return jnp.zeros((B, k), jnp.float32)

    M, D = refs.shape
    assert x.shape[1] == D

    Dp = _round_up(D, 128)
    Mp = _round_up(M, 128)
    Kp = _round_up(k, 128)                 # lane-dense output slab
    TB = min(_round_up(B, 8), 128)         # batch tile keeps VMEM bounded
    Bp = _round_up(B, TB)

    x_p = jnp.pad(x.astype(jnp.float32), ((0, Bp - B), (0, Dp - D)))
    r_p = jnp.pad(refs.astype(jnp.float32), ((0, Mp - M), (0, Dp - D)))
    rt_p = r_p.T                                               # (Dp, Mp)
    rsq = jnp.sum(r_p * r_p, axis=1)[None, :]                  # (1, Mp)

    kernel = functools.partial(_knn_kernel, k=k, sigma=sigma, n_valid=M)

    cost = pl.CostEstimate(
        flops=int(2 * Bp * Dp * Mp + 8 * Bp * Mp),
        transcendentals=int(Bp * (k + 1)),
        bytes_accessed=int(4 * (Bp * Dp + Dp * Mp + Mp + Bp * Kp)),
    )

    out = pl.pallas_call(
        kernel,
        out_shape=jax.ShapeDtypeStruct((Bp, Kp), jnp.float32),
        grid_spec=pltpu.PrefetchScalarGridSpec(
            num_scalar_prefetch=0,
            grid=(Bp // TB,),
            in_specs=[
                pl.BlockSpec((TB, Dp), lambda i: (i, 0)),   # x tile
                pl.BlockSpec((Dp, Mp), lambda i: (0, 0)),   # reference^T (resident)
                pl.BlockSpec((1, Mp), lambda i: (0, 0)),    # ||ref||^2
            ],
            out_specs=pl.BlockSpec((TB, Kp), lambda i: (i, 0)),
        ),
        compiler_params=pltpu.CompilerParams(
            dimension_semantics=("parallel",),
        ),
        cost_estimate=cost,
    )(x_p, rt_p, rsq)
    return out[:B, :k]


def knn_update(params, x):
    """KNNMapper.update: store L2-normalized reference points (training mode)."""
    if params["reference_points"] is None:
        norm = jnp.sqrt(jnp.sum(x.astype(jnp.float32) ** 2, axis=1, keepdims=True))
        params = dict(params, reference_points=x.astype(jnp.float32)
                      / jnp.maximum(norm, _EPS))
    return params


# Pure-JAX reference (for correctness checking only)
def _knn_forward_ref(params, x):
    refs = params["reference_points"]
    k, sigma = params["k"], params["sigma"]
    if refs is None:
        return jnp.zeros((x.shape[0], k), jnp.float32)
    xn = x / jnp.maximum(jnp.linalg.norm(x, axis=1, keepdims=True), _EPS)
    d = jnp.sqrt(jnp.maximum(
        jnp.sum((xn[:, None, :] - refs[None, :, :]) ** 2, axis=-1), 0.0))
    neg_top, _ = lax.top_k(-d, k)          # k smallest, ascending
    w = jnp.exp(neg_top / sigma)           # exp(-d/sigma)
    return w / jnp.maximum(jnp.sum(w, axis=1, keepdims=True), _EPS)


if __name__ == "__main__":
    key = jax.random.PRNGKey(0)
    kref, kx = jax.random.split(key)

    feature_dim, k, sigma = 32, 5, 1.0
    params = {"k": k, "sigma": sigma, "reference_points": None}

    x = jax.random.normal(kx, (2, feature_dim), jnp.float32)

    # Path 1: reference_points is None -> zeros(B, k)
    z = knn_forward(params, x)
    assert z.shape == (2, k) and bool(jnp.all(z == 0.0)), z

    # Path 2: after update() with a reference batch (training mode)
    refs_raw = jax.random.normal(kref, (16, feature_dim), jnp.float32)
    params = knn_update(params, refs_raw)

    fwd = jax.jit(lambda inp: knn_forward(params, inp))
    out = jax.block_until_ready(fwd(x))

    ref = _knn_forward_ref(params, x)
    assert out.shape == (2, k), out.shape
    assert bool(jnp.all(jnp.isfinite(out)))
    assert bool(jnp.allclose(jnp.sum(out, axis=1), 1.0, atol=1e-5))
    assert bool(jnp.allclose(out, ref, atol=1e-4, rtol=1e-4))
    print("KERNEL_OK")
</pallas_src>

<mosaic_0001>
module attributes {stable_mosaic.version = 11 : i64} {
  func.func @_knn_kernel(%arg0: i32, %arg1: memref<8x128xf32, #tpu.memory_space<vmem>>, %arg2: memref<128x128xf32, #tpu.memory_space<vmem>>, %arg3: memref<1x128xf32, #tpu.memory_space<vmem>>, %arg4: memref<8x128xf32, #tpu.memory_space<vmem>>) attributes {dimension_semantics = [#tpu.dimension_semantics<parallel>], iteration_bounds = array<i64: 1>, scalar_prefetch = 0 : i64, scratch_operands = 0 : i64, tpu.core_type = #tpu.core_type<tc>, window_params = [{transform_indices = @transform_0, window_bounds = array<i64: 8, 128>}, {pipeline_mode = #tpu.pipeline_mode<synchronous>, transform_indices = @transform_1, window_bounds = array<i64: 128, 128>}, {pipeline_mode = #tpu.pipeline_mode<synchronous>, transform_indices = @transform_2, window_bounds = array<i64: 1, 128>}, {transform_indices = @transform_3, window_bounds = array<i64: 8, 128>}]} {
    %c0 = arith.constant 0 : index
    %c0_0 = arith.constant 0 : index
    %0 = vector.load %arg1[%c0, %c0_0] : memref<8x128xf32, #tpu.memory_space<vmem>>, vector<8x128xf32>
    %1 = arith.mulf %0, %0 : vector<8x128xf32>
    %cst = arith.constant dense<0.000000e+00> : vector<8xf32>
    %2 = vector.multi_reduction <add>, %1, %cst [1] : vector<8x128xf32> to vector<8xf32>
    %3 = vector.shape_cast %2 : vector<8xf32> to vector<8x1xf32>
    %4 = math.sqrt %3 : vector<8x1xf32>
    %cst_1 = arith.constant 9.99999996E-13 : f32
    %5 = vector.broadcast %cst_1 : f32 to vector<8x1xf32>
    %6 = arith.maximumf %4, %5 : vector<8x1xf32>
    %7 = vector.broadcast %6 : vector<8x1xf32> to vector<8x128xf32>
    %8 = arith.divf %0, %7 : vector<8x128xf32>
    %9 = arith.mulf %8, %8 : vector<8x128xf32>
    %cst_2 = arith.constant dense<0.000000e+00> : vector<8xf32>
    %10 = vector.multi_reduction <add>, %9, %cst_2 [1] : vector<8x128xf32> to vector<8xf32>
    %11 = vector.shape_cast %10 : vector<8xf32> to vector<8x1xf32>
    %c0_3 = arith.constant 0 : index
    %c0_4 = arith.constant 0 : index
    %12 = vector.load %arg2[%c0_3, %c0_4] : memref<128x128xf32, #tpu.memory_space<vmem>>, vector<128x128xf32>
    %cst_5 = arith.constant dense<0.000000e+00> : vector<8x128xf32>
    %13 = tpu.matmul %8, %12, %cst_5 {dimension_numbers = #tpu.dot_dimension_numbers<[1], [0], [0], [1], [0, 0, 1, 1], [], []>} : vector<8x128xf32>, vector<128x128xf32>, vector<8x128xf32> -> vector<8x128xf32>
    %c0_6 = arith.constant 0 : index
    %c0_7 = arith.constant 0 : index
    %14 = vector.load %arg3[%c0_6, %c0_7] : memref<1x128xf32, #tpu.memory_space<vmem>>, vector<1x128xf32>
    %15 = vector.broadcast %11 : vector<8x1xf32> to vector<8x128xf32>
    %16 = vector.broadcast %14 : vector<1x128xf32> to vector<8x128xf32>
    %17 = arith.addf %15, %16 : vector<8x128xf32>
    %cst_8 = arith.constant 2.000000e+00 : f32
    %18 = vector.broadcast %cst_8 : f32 to vector<8x128xf32>
    %19 = arith.mulf %18, %13 : vector<8x128xf32>
    %20 = arith.subf %17, %19 : vector<8x128xf32>
    %cst_9 = arith.constant 0.000000e+00 : f32
    %21 = vector.broadcast %cst_9 : f32 to vector<8x128xf32>
    %22 = arith.maximumf %20, %21 : vector<8x128xf32>
    %23 = math.sqrt %22 : vector<8x128xf32>
    %24 = tpu.iota {dimensions = array<i32: 1>} : vector<8x128xi32>
    %c16_i32 = arith.constant 16 : i32
    %25 = vector.broadcast %c16_i32 : i32 to vector<8x128xi32>
    %26 = arith.cmpi slt, %24, %25 : vector<8x128xi32>
    %cst_10 = arith.constant 0x7F800000 : f32
    %27 = vector.broadcast %cst_10 : f32 to vector<8x128xf32>
    %28 = arith.select %26, %23, %27 : vector<8x128xi1>, vector<8x128xf32>
    %29 = tpu.iota {dimensions = array<i32: 1>} : vector<8x128xi32>
    %cst_11 = arith.constant 0.000000e+00 : f32
    %30 = vector.broadcast %cst_11 : f32 to vector<8x128xf32>
    %cst_12 = arith.constant dense<0x7F800000> : vector<8xf32>
    %31 = vector.multi_reduction <minimumf>, %28, %cst_12 [1] : vector<8x128xf32> to vector<8xf32>
    %32 = vector.shape_cast %31 : vector<8xf32> to vector<8x1xf32>
    %33 = vector.broadcast %32 : vector<8x1xf32> to vector<8x128xf32>
    %34 = arith.cmpf oeq, %28, %33 : vector<8x128xf32>
    %c128_i32 = arith.constant 128 : i32
    %35 = vector.broadcast %c128_i32 : i32 to vector<8x128xi32>
    %36 = arith.select %34, %24, %35 : vector<8x128xi1>, vector<8x128xi32>
    %cst_13 = arith.constant dense<2147483647> : vector<8xi32>
    %37 = vector.multi_reduction <minsi>, %36, %cst_13 [1] : vector<8x128xi32> to vector<8xi32>
    %38 = vector.shape_cast %37 : vector<8xi32> to vector<8x1xi32>
    %39 = vector.broadcast %38 : vector<8x1xi32> to vector<8x128xi32>
    %40 = arith.cmpi eq, %24, %39 : vector<8x128xi32>
    %cst_14 = arith.constant 0x7F800000 : f32
    %41 = vector.broadcast %cst_14 : f32 to vector<8x128xf32>
    %42 = arith.select %40, %41, %28 : vector<8x128xi1>, vector<8x128xf32>
    %c0_i32 = arith.constant 0 : i32
    %43 = vector.broadcast %c0_i32 : i32 to vector<8x128xi32>
    %44 = arith.cmpi eq, %29, %43 : vector<8x128xi32>
    %cst_15 = arith.constant 0.000000e+00 : f32
    %45 = vector.broadcast %cst_15 : f32 to vector<8x1xf32>
    %46 = arith.subf %45, %32 : vector<8x1xf32>
    %cst_16 = arith.constant 1.000000e+00 : f32
    %47 = vector.broadcast %cst_16 : f32 to vector<8x1xf32>
    %48 = arith.divf %46, %47 : vector<8x1xf32>
    %49 = math.exp %48 : vector<8x1xf32>
    %50 = vector.shape_cast %49 : vector<8x1xf32> to vector<8x1xf32>
    %51 = vector.broadcast %50 : vector<8x1xf32> to vector<8x128xf32>
    %52 = arith.select %44, %51, %30 : vector<8x128xi1>, vector<8x128xf32>
    %cst_17 = arith.constant dense<0x7F800000> : vector<8xf32>
    %53 = vector.multi_reduction <minimumf>, %42, %cst_17 [1] : vector<8x128xf32> to vector<8xf32>
    %54 = vector.shape_cast %53 : vector<8xf32> to vector<8x1xf32>
    %55 = vector.broadcast %54 : vector<8x1xf32> to vector<8x128xf32>
    %56 = arith.cmpf oeq, %42, %55 : vector<8x128xf32>
    %c128_i32_18 = arith.constant 128 : i32
    %57 = vector.broadcast %c128_i32_18 : i32 to vector<8x128xi32>
    %58 = arith.select %56, %24, %57 : vector<8x128xi1>, vector<8x128xi32>
    %cst_19 = arith.constant dense<2147483647> : vector<8xi32>
    %59 = vector.multi_reduction <minsi>, %58, %cst_19 [1] : vector<8x128xi32> to vector<8xi32>
    %60 = vector.shape_cast %59 : vector<8xi32> to vector<8x1xi32>
    %61 = vector.broadcast %60 : vector<8x1xi32> to vector<8x128xi32>
    %62 = arith.cmpi eq, %24, %61 : vector<8x128xi32>
    %cst_20 = arith.constant 0x7F800000 : f32
    %63 = vector.broadcast %cst_20 : f32 to vector<8x128xf32>
    %64 = arith.select %62, %63, %42 : vector<8x128xi1>, vector<8x128xf32>
    %c1_i32 = arith.constant 1 : i32
    %65 = vector.broadcast %c1_i32 : i32 to vector<8x128xi32>
    %66 = arith.cmpi eq, %29, %65 : vector<8x128xi32>
    %cst_21 = arith.constant 0.000000e+00 : f32
    %67 = vector.broadcast %cst_21 : f32 to vector<8x1xf32>
    %68 = arith.subf %67, %54 : vector<8x1xf32>
    %cst_22 = arith.constant 1.000000e+00 : f32
    %69 = vector.broadcast %cst_22 : f32 to vector<8x1xf32>
    %70 = arith.divf %68, %69 : vector<8x1xf32>
    %71 = math.exp %70 : vector<8x1xf32>
    %72 = vector.shape_cast %71 : vector<8x1xf32> to vector<8x1xf32>
    %73 = vector.broadcast %72 : vector<8x1xf32> to vector<8x128xf32>
    %74 = arith.select %66, %73, %52 : vector<8x128xi1>, vector<8x128xf32>
    %cst_23 = arith.constant dense<0x7F800000> : vector<8xf32>
    %75 = vector.multi_reduction <minimumf>, %64, %cst_23 [1] : vector<8x128xf32> to vector<8xf32>
    %76 = vector.shape_cast %75 : vector<8xf32> to vector<8x1xf32>
    %77 = vector.broadcast %76 : vector<8x1xf32> to vector<8x128xf32>
    %78 = arith.cmpf oeq, %64, %77 : vector<8x128xf32>
    %c128_i32_24 = arith.constant 128 : i32
    %79 = vector.broadcast %c128_i32_24 : i32 to vector<8x128xi32>
    %80 = arith.select %78, %24, %79 : vector<8x128xi1>, vector<8x128xi32>
    %cst_25 = arith.constant dense<2147483647> : vector<8xi32>
    %81 = vector.multi_reduction <minsi>, %80, %cst_25 [1] : vector<8x128xi32> to vector<8xi32>
    %82 = vector.shape_cast %81 : vector<8xi32> to vector<8x1xi32>
    %83 = vector.broadcast %82 : vector<8x1xi32> to vector<8x128xi32>
    %84 = arith.cmpi eq, %24, %83 : vector<8x128xi32>
    %cst_26 = arith.constant 0x7F800000 : f32
    %85 = vector.broadcast %cst_26 : f32 to vector<8x128xf32>
    %86 = arith.select %84, %85, %64 : vector<8x128xi1>, vector<8x128xf32>
    %c2_i32 = arith.constant 2 : i32
    %87 = vector.broadcast %c2_i32 : i32 to vector<8x128xi32>
    %88 = arith.cmpi eq, %29, %87 : vector<8x128xi32>
    %cst_27 = arith.constant 0.000000e+00 : f32
    %89 = vector.broadcast %cst_27 : f32 to vector<8x1xf32>
    %90 = arith.subf %89, %76 : vector<8x1xf32>
    %cst_28 = arith.constant 1.000000e+00 : f32
    %91 = vector.broadcast %cst_28 : f32 to vector<8x1xf32>
    %92 = arith.divf %90, %91 : vector<8x1xf32>
    %93 = math.exp %92 : vector<8x1xf32>
    %94 = vector.shape_cast %93 : vector<8x1xf32> to vector<8x1xf32>
    %95 = vector.broadcast %94 : vector<8x1xf32> to vector<8x128xf32>
    %96 = arith.select %88, %95, %74 : vector<8x128xi1>, vector<8x128xf32>
    %cst_29 = arith.constant dense<0x7F800000> : vector<8xf32>
    %97 = vector.multi_reduction <minimumf>, %86, %cst_29 [1] : vector<8x128xf32> to vector<8xf32>
    %98 = vector.shape_cast %97 : vector<8xf32> to vector<8x1xf32>
    %99 = vector.broadcast %98 : vector<8x1xf32> to vector<8x128xf32>
    %100 = arith.cmpf oeq, %86, %99 : vector<8x128xf32>
    %c128_i32_30 = arith.constant 128 : i32
    %101 = vector.broadcast %c128_i32_30 : i32 to vector<8x128xi32>
    %102 = arith.select %100, %24, %101 : vector<8x128xi1>, vector<8x128xi32>
    %cst_31 = arith.constant dense<2147483647> : vector<8xi32>
    %103 = vector.multi_reduction <minsi>, %102, %cst_31 [1] : vector<8x128xi32> to vector<8xi32>
    %104 = vector.shape_cast %103 : vector<8xi32> to vector<8x1xi32>
    %105 = vector.broadcast %104 : vector<8x1xi32> to vector<8x128xi32>
    %106 = arith.cmpi eq, %24, %105 : vector<8x128xi32>
    %cst_32 = arith.constant 0x7F800000 : f32
    %107 = vector.broadcast %cst_32 : f32 to vector<8x128xf32>
    %108 = arith.select %106, %107, %86 : vector<8x128xi1>, vector<8x128xf32>
    %c3_i32 = arith.constant 3 : i32
    %109 = vector.broadcast %c3_i32 : i32 to vector<8x128xi32>
    %110 = arith.cmpi eq, %29, %109 : vector<8x128xi32>
    %cst_33 = arith.constant 0.000000e+00 : f32
    %111 = vector.broadcast %cst_33 : f32 to vector<8x1xf32>
    %112 = arith.subf %111, %98 : vector<8x1xf32>
    %cst_34 = arith.constant 1.000000e+00 : f32
    %113 = vector.broadcast %cst_34 : f32 to vector<8x1xf32>
    %114 = arith.divf %112, %113 : vector<8x1xf32>
    %115 = math.exp %114 : vector<8x1xf32>
    %116 = vector.shape_cast %115 : vector<8x1xf32> to vector<8x1xf32>
    %117 = vector.broadcast %116 : vector<8x1xf32> to vector<8x128xf32>
    %118 = arith.select %110, %117, %96 : vector<8x128xi1>, vector<8x128xf32>
    %cst_35 = arith.constant dense<0x7F800000> : vector<8xf32>
    %119 = vector.multi_reduction <minimumf>, %108, %cst_35 [1] : vector<8x128xf32> to vector<8xf32>
    %120 = vector.shape_cast %119 : vector<8xf32> to vector<8x1xf32>
    %c4_i32 = arith.constant 4 : i32
    %121 = vector.broadcast %c4_i32 : i32 to vector<8x128xi32>
    %122 = arith.cmpi eq, %29, %121 : vector<8x128xi32>
    %cst_36 = arith.constant 0.000000e+00 : f32
    %123 = vector.broadcast %cst_36 : f32 to vector<8x1xf32>
    %124 = arith.subf %123, %120 : vector<8x1xf32>
    %cst_37 = arith.constant 1.000000e+00 : f32
    %125 = vector.broadcast %cst_37 : f32 to vector<8x1xf32>
    %126 = arith.divf %124, %125 : vector<8x1xf32>
    %127 = math.exp %126 : vector<8x1xf32>
    %128 = vector.shape_cast %127 : vector<8x1xf32> to vector<8x1xf32>
    %129 = vector.broadcast %128 : vector<8x1xf32> to vector<8x128xf32>
    %130 = arith.select %122, %129, %118 : vector<8x128xi1>, vector<8x128xf32>
    %cst_38 = arith.constant dense<0.000000e+00> : vector<8xf32>
    %131 = vector.multi_reduction <add>, %130, %cst_38 [1] : vector<8x128xf32> to vector<8xf32>
    %132 = vector.shape_cast %131 : vector<8xf32> to vector<8x1xf32>
    %cst_39 = arith.constant 9.99999996E-13 : f32
    %133 = vector.broadcast %cst_39 : f32 to vector<8x1xf32>
    %134 = arith.maximumf %132, %133 : vector<8x1xf32>
    %135 = vector.broadcast %134 : vector<8x1xf32> to vector<8x128xf32>
    %136 = arith.divf %130, %135 : vector<8x128xf32>
    %c0_40 = arith.constant 0 : index
    %c0_41 = arith.constant 0 : index
    %137 = vector.load %arg4[%c0_40, %c0_41] : memref<8x128xf32, #tpu.memory_space<vmem>>, vector<8x128xf32>
    tpu.vector_store %arg4[%c0_40, %c0_41], %136 {strides = array<i32>} : memref<8x128xf32, #tpu.memory_space<vmem>>, vector<8x128xf32>,
    return
  }
  func.func @transform_0(%arg0: i32) -> (i32, i32) {
    %c0_i32 = arith.constant 0 : i32
    %c0_i32_0 = arith.constant 0 : i32
    return %arg0, %c0_i32 : i32, i32
  }
  func.func @transform_1(%arg0: i32) -> (i32, i32) {
    %c0_i32 = arith.constant 0 : i32
    %c0_i32_0 = arith.constant 0 : i32
    %c0_i32_1 = arith.constant 0 : i32
    return %c0_i32, %c0_i32_0 : i32, i32
  }
  func.func @transform_2(%arg0: i32) -> (i32, i32) {
    %c0_i32 = arith.constant 0 : i32
    %c0_i32_0 = arith.constant 0 : i32
    %c0_i32_1 = arith.constant 0 : i32
    return %c0_i32, %c0_i32_0 : i32, i32
  }
  func.func @transform_3(%arg0: i32) -> (i32, i32) {
    %c0_i32 = arith.constant 0 : i32
    %c0_i32_0 = arith.constant 0 : i32
    return %arg0, %c0_i32 : i32, i32
  }
}

</mosaic_0001>

<llo_original>
// kernel: _lambda_.1
$region0: #{_lambda_.1}
  #allocation0 [shape = 'u32[]', space=smem, size = 0x4, offset = 0x4, fixed_abs, tag = 'smem constant byte address 0x4 - core index']
  #allocation1 [shape = 'u32[72,128]{1,0:T(1,128)}', space=vmem, size = 0x9000, scoped, tag = 'internal scratch']
  %s0 = inlined_call_operand.vmem [shape: f32[8,128], index: 0, kind: input, shape index: {}]
  %s1 = inlined_call_operand.hbm [shape: f32[128,128], index: 1, kind: input, shape index: {}]
  %s2 = inlined_call_operand.vmem [shape: f32[1,128], index: 2, kind: input, shape index: {}]
  %s3 = inlined_call_operand.vmem [shape: f32[8,128], index: 3, kind: output, shape index: {}]
  %s4 = sld [smem:[#allocation0]]
  $region26: #{_lambda_.1} parent=0
    _
  %s6 = ssub.s32 1, %s4
  %s7 = scalar_select 0, %s6, %s4
  $region1: #{_lambda_.1} parent=0
    #allocation2 [shape = 'u8[65536]{0}', space=vmem, size = 0x10000, scoped, tag = 'input window, operand 1, single buffered']
    #allocation3 [shape = 's32[1]{0}', space=sflag, size = 0x4, scoped, tag = 'scoped memory for _lambda_.1']
    %8 = vsyncpa [#allocation3], 0
    // Predicated region
    $region2: #{_lambda_.1} parent=1 // pred_check
      _
    $region3: #{_lambda_.1} parent=1 // pred_check_branch
      %10 = sbr.rel (0) target = $region5
    $region4: #{_lambda_.1} parent=1 // pred_region
      _
    $region5: #{_lambda_.1} parent=1 // pred_fallthru
      _
    // Predicated region
    $region6: #{_lambda_.1} parent=1 // pred_check
      _
    $region7: #{_lambda_.1} parent=1 // pred_check_branch
      %12 = sbr.rel (0) target = $region9
    $region8: #{_lambda_.1} parent=1 // pred_region
      %14 = vsyncadd [#allocation3], 0
      %s15 = sshll.u32 %s1, 4
      %s16 = int_to_ptr.hbm [resolvable:$true] %s15
      %s17 = sshll.u32 [#allocation2], 4
      %s18 = int_to_ptr.vmem [resolvable:$true] %s17
      %23 = dma.hbm_to_vmem [thread:$0]  %s16, 2048, %s18, [#allocation3], 128, 128, 8
    $region9: #{_lambda_.1} parent=1 // pred_fallthru
      _
    // Predicated region
    $region10: #{_lambda_.1} parent=1 // pred_check
      _
    $region11: #{_lambda_.1} parent=1 // pred_check_branch
      %25 = sbr.rel (0) target = $region13
    $region12: #{_lambda_.1} parent=1 // pred_region
      _
    $region13: #{_lambda_.1} parent=1 // pred_fallthru
      _
    // Predicated region
    $region14: #{_lambda_.1} parent=1 // pred_check
      _
    $region15: #{_lambda_.1} parent=1 // pred_check_branch
      %27 = sbr.rel (0) target = $region17
    $region16: #{_lambda_.1} parent=1 // pred_region
      %29 = dma.done [#allocation3], 2048
    $region17: #{_lambda_.1} parent=1 // pred_fallthru
      _
    %v30 = vld [vmem:[%s0] sm:$0xff]
    %v31 = vmul.f32 %v30, %v30
    %32 = vadd.xlane.f32.xlu0 %v31
    %v33 = vpop.xlane.xlu0 %32
    %v34 = vrsqrt.pop %v33
    %v35 = vmul.f32 %v34, %v33
    %v36 = vmul.f32 %v35, %v34
    %v37 = vmul.f32 0.5, %v36
    %v38 = vsub.f32 1.5, %v37
    %v39 = vmul.f32 %v34, %v38
    %v40 = vmul.f32 %v33, %v39
    %vm41 = vcmp.eq.f32.partialorder %v33, inf
    %v42 = vsel %vm41, %v33, %v40
    %vm43 = vcmp.eq.f32.partialorder %v33, 0.0
    %v44 = vand.u32 %v33, 2147483648
    %v45 = vsel %vm43, %v44, %v42
    %v46 = vmax.f32 %v45, 1e-12
    %v47 = vrcp.pop %v46
    %v48 = vmul.f32 %v46, %v47
    %v49 = vsub.f32 1.0, %v48
    %v50 = vmul.f32 %v47, %v49
    %v51 = vadd.f32 %v47, %v50
    %vm52 = vweird.f32 %v46
    %vm53 = vweird.f32 %v47
    %vm54 = vmor %vm52, %vm53
    %v55 = vsel %vm54, %v47, %v51
    %v56 = vand.u32 2147483647, %v46
    %vm57 = vcmp.eq.f32.partialorder %v56, 8.507059e+37
    %v58 = vand.u32 %v46, 2147483648
    %v59 = vor.u32 1.1754944e-38, %v58
    %v60 = vsel %vm57, %v59, %v55
    %v61 = vmul.f32 %v30, %v60
    %v62 = vmul.f32 %v61, %v61
    %63 = vadd.xlane.f32.xlu0 %v62
    %v64 = vpop.xlane.xlu0 %63
    %v65 = vld [vmem:[#allocation2] sm:$0xff]
    %v66 = vld [vmem:[#allocation2 + $0x8] sm:$0xff]
    %v67 = vld [vmem:[#allocation2 + $0x10] sm:$0xff]
    %v68 = vld [vmem:[#allocation2 + $0x18] sm:$0xff]
    %v69 = vld [vmem:[#allocation2 + $0x20] sm:$0xff]
    %v70 = vld [vmem:[#allocation2 + $0x28] sm:$0xff]
    %v71 = vld [vmem:[#allocation2 + $0x30] sm:$0xff]
    %v72 = vld [vmem:[#allocation2 + $0x38] sm:$0xff]
    %v73 = vld [vmem:[#allocation2 + $0x40] sm:$0xff]
    %v74 = vld [vmem:[#allocation2 + $0x48] sm:$0xff]
    %v75 = vld [vmem:[#allocation2 + $0x50] sm:$0xff]
    %v76 = vld [vmem:[#allocation2 + $0x58] sm:$0xff]
    %v77 = vld [vmem:[#allocation2 + $0x60] sm:$0xff]
    %v78 = vld [vmem:[#allocation2 + $0x68] sm:$0xff]
    %v79 = vld [vmem:[#allocation2 + $0x70] sm:$0xff]
    %v80 = vld [vmem:[#allocation2 + $0x78] sm:$0xff]
    %81 = vmatpush.msra.mxu0 %v80
    %82 = vmatpush.msra.mxu0 %v79
    %83 = vmatpush.msra.mxu0 %v78
    %84 = vmatpush.msra.mxu0 %v77
    %85 = vmatpush.msra.mxu0 %v76
    %86 = vmatpush.msra.mxu0 %v75
    %87 = vmatpush.msra.mxu0 %v74
    %88 = vmatpush.msra.mxu0 %v73
    %89 = vmatpush.msra.mxu0 %v72
    %90 = vmatpush.msra.mxu0 %v71
    %91 = vmatpush.msra.mxu0 %v70
    %92 = vmatpush.msra.mxu0 %v69
    %93 = vmatpush.msra.mxu0 %v68
    %94 = vmatpush.msra.mxu0 %v67
    %95 = vmatpush.msra.mxu0 %v66
    %96 = vmatpush.msra.mxu0 %v65
    %97 = vmatmul.f32.gmra.mxu0 %v61
    %v98 = vpop.f32.mrf.mxu0
    %v99 = vadd.f32 0.0, %v98
    %100 = vdwg.mxu0
    %v101 = vld [vmem:[%s2] sm:$0x1]
    %v103 = vperm.slane %v101, 0
    %v105 = vadd.f32 %v64, %v103
    %v106 = vmul.f32 %v99, 2.0
    %v107 = vsub.f32 %v105, %v106
    %v108 = vmax.f32 %v107, 0.0
    %v109 = vrsqrt.pop %v108
    %v110 = vmul.f32 %v109, %v108
    %v111 = vmul.f32 %v110, %v109
    %v112 = vmul.f32 0.5, %v111
    %v113 = vsub.f32 1.5, %v112
    %v114 = vmul.f32 %v109, %v113
    %v115 = vmul.f32 %v108, %v114
    %vm116 = vcmp.eq.f32.partialorder %v108, inf
    %v117 = vsel %vm116, %v108, %v115
    %vm118 = vcmp.eq.f32.partialorder %v108, 0.0
    %v119 = vand.u32 %v108, 2147483648
    %v120 = vsel %vm118, %v119, %v117
    %v121 = vlaneseq
    %v122 = vand.u32 %v121, 127
    %vm123 = vcmp.lt.s32.totalorder %v122, 16
    %v124 = vsel %vm123, %v120, inf
    %125 = vmin.xlane.f32.xlu0 %v124
    %v126 = vpop.xlane.xlu0 %125
    %vm127 = vcmp.eq.f32.partialorder %v124, %v126
    %v128 = vsel %vm127, %v122, 128
    %v129 = vand.u32 %v128, 65535
    %v130 = vshra.s32 %v128, 16
    %v131 = vcvt.s32.f32 %v129
    %v132 = vcvt.s32.f32 %v130
    %133 = vmin.xlane.f32.xlu0 %v132
    %v134 = vpop.xlane.xlu0 %133
    %vm135 = vcmp.eq.f32.partialorder %v132, %v134
    %v136 = vsel %vm135, %v131, inf
    %137 = vmin.xlane.f32.xlu0 %v136
    %v138 = vpop.xlane.xlu0 %137
    %v139 = vcvt.f32.s32 %v138
    %v140 = vcvt.f32.s32 %v134
    %v141 = vshll.u32 %v140, 16
    %v142 = vadd.s32 %v141, %v139
    %vm143 = vcmp.eq.s32.totalorder %v122, %v142
    %v144 = vsel %vm143, inf, %v124
    %vm145 = vcmp.eq.s32.totalorder %v122, 0
    %v146 = vsub.f32 0.0, %v126
    %v147 = vmul.f32 %v146, 1.442695
    %v148 = vpow.pop %v147
    %v149 = vsel %vm145, %v148, 0.0
    %150 = vmin.xlane.f32.xlu0 %v144
    %v151 = vpop.xlane.xlu0 %150
    %vm152 = vcmp.eq.f32.partialorder %v144, %v151
    %v153 = vsel %vm152, %v122, 128
    %v154 = vand.u32 %v153, 65535
    %v155 = vshra.s32 %v153, 16
    %v156 = vcvt.s32.f32 %v154
    %v157 = vcvt.s32.f32 %v155
    %158 = vmin.xlane.f32.xlu0 %v157
    %v159 = vpop.xlane.xlu0 %158
    %vm160 = vcmp.eq.f32.partialorder %v157, %v159
    %v161 = vsel %vm160, %v156, inf
    %162 = vmin.xlane.f32.xlu0 %v161
    %v163 = vpop.xlane.xlu0 %162
    %v164 = vcvt.f32.s32 %v163
    %v165 = vcvt.f32.s32 %v159
    %v166 = vshll.u32 %v165, 16
    %v167 = vadd.s32 %v166, %v164
    %vm168 = vcmp.eq.s32.totalorder %v122, %v167
    %v169 = vsel %vm168, inf, %v144
    %vm170 = vcmp.eq.s32.totalorder %v122, 1
    %v171 = vsub.f32 0.0, %v151
    %v172 = vmul.f32 %v171, 1.442695
    %v173 = vpow.pop %v172
    %v174 = vsel %vm170, %v173, %v149
    %175 = vmin.xlane.f32.xlu0 %v169
    %v176 = vpop.xlane.xlu0 %175
    %vm177 = vcmp.eq.f32.partialorder %v169, %v176
    %v178 = vsel %vm177, %v122, 128
    %v179 = vand.u32 %v178, 65535
    %v180 = vshra.s32 %v178, 16
    %v181 = vcvt.s32.f32 %v179
    %v182 = vcvt.s32.f32 %v180
    %183 = vmin.xlane.f32.xlu0 %v182
    %v184 = vpop.xlane.xlu0 %183
    %vm185 = vcmp.eq.f32.partialorder %v182, %v184
    %v186 = vsel %vm185, %v181, inf
    %187 = vmin.xlane.f32.xlu0 %v186
    %v188 = vpop.xlane.xlu0 %187
    %v189 = vcvt.f32.s32 %v188
    %v190 = vcvt.f32.s32 %v184
    %v191 = vshll.u32 %v190, 16
    %v192 = vadd.s32 %v191, %v189
    %vm193 = vcmp.eq.s32.totalorder %v122, %v192
    %v194 = vsel %vm193, inf, %v169
    %vm195 = vcmp.eq.s32.totalorder %v122, 2
    %v196 = vsub.f32 0.0, %v176
    %v197 = vmul.f32 %v196, 1.442695
    %v198 = vpow.pop %v197
    %v199 = vsel %vm195, %v198, %v174
    %200 = vmin.xlane.f32.xlu0 %v194
    %v201 = vpop.xlane.xlu0 %200
    %vm202 = vcmp.eq.f32.partialorder %v194, %v201
    %v203 = vsel %vm202, %v122, 128
    %v204 = vand.u32 %v203, 65535
    %v205 = vshra.s32 %v203, 16
    %v206 = vcvt.s32.f32 %v204
    %v207 = vcvt.s32.f32 %v205
    %208 = vmin.xlane.f32.xlu0 %v207
    %v209 = vpop.xlane.xlu0 %208
    %vm210 = vcmp.eq.f32.partialorder %v207, %v209
    %v211 = vsel %vm210, %v206, inf
    %212 = vmin.xlane.f32.xlu0 %v211
    %v213 = vpop.xlane.xlu0 %212
    %v214 = vcvt.f32.s32 %v213
    %v215 = vcvt.f32.s32 %v209
    %v216 = vshll.u32 %v215, 16
    %v217 = vadd.s32 %v216, %v214
    %vm218 = vcmp.eq.s32.totalorder %v122, %v217
    %v219 = vsel %vm218, inf, %v194
    %vm220 = vcmp.eq.s32.totalorder %v122, 3
    %v221 = vsub.f32 0.0, %v201
    %v222 = vmul.f32 %v221, 1.442695
    %v223 = vpow.pop %v222
    %v224 = vsel %vm220, %v223, %v199
    %225 = vmin.xlane.f32.xlu0 %v219
    %v226 = vpop.xlane.xlu0 %225
    %vm227 = vcmp.eq.s32.totalorder %v122, 4
    %v228 = vsub.f32 0.0, %v226
    %v229 = vmul.f32 %v228, 1.442695
    %v230 = vpow.pop %v229
    %v231 = vsel %vm227, %v230, %v224
    %232 = vadd.xlane.f32.xlu0 %v231
    %v233 = vpop.xlane.xlu0 %232
    %v234 = vmax.f32 %v233, 1e-12
    %v235 = vrcp.pop %v234
    %v236 = vmul.f32 %v234, %v235
    %v237 = vsub.f32 1.0, %v236
    %v238 = vmul.f32 %v235, %v237
    %v239 = vadd.f32 %v235, %v238
    %vm240 = vweird.f32 %v234
    %vm241 = vweird.f32 %v235
    %vm242 = vmor %vm240, %vm241
    %v243 = vsel %vm242, %v235, %v239
    %v244 = vand.u32 2147483647, %v234
    %vm245 = vcmp.eq.f32.partialorder %v244, 8.507059e+37
    %v246 = vand.u32 %v234, 2147483648
    %v247 = vor.u32 1.1754944e-38, %v246
    %v248 = vsel %vm245, %v247, %v243
    %v249 = vmul.f32 %v231, %v248
    %250 = vst [vmem:[%s3] sm:$0xff] %v249
    // Predicated region
    $region18: #{_lambda_.1} parent=1 // pred_check
      _
    $region19: #{_lambda_.1} parent=1 // pred_check_branch
      %252 = sbr.rel (0) target = $region21
    $region20: #{_lambda_.1} parent=1 // pred_region
      _
    $region21: #{_lambda_.1} parent=1 // pred_fallthru
      _
    // Predicated region
    $region22: #{_lambda_.1} parent=1 // pred_check
      _
    $region23: #{_lambda_.1} parent=1 // pred_check_branch
      %254 = sbr.rel (0) target = $region25
    $region24: #{_lambda_.1} parent=1 // pred_region
      _
    $region25: #{_lambda_.1} parent=1 // pred_fallthru
      _
    %255 = vsyncpa [#allocation3], 1

</llo_original>
